<compile_context>
chip_gen: v7x
topology: tpu7x:2x2x1
jax: 0.10.0
libtpu: 0.0.40
codegen_flags: <defaults>
</compile_context>

<pallas_src>
import functools

import jax
import jax.numpy as jnp
from jax.experimental import pallas as pl
from jax.experimental.pallas import tpu as pltpu


def _round_up(x, m):
    return -(-x // m) * m


def _pick_block_batch(B):
    """Batch tile (multiple of 16 => full bf16 sublane packing).

    Picks the largest tile <= 1024 rows such that the grid has an EVEN number
    of steps (>= 2) whenever B allows it:
      * big tiles amortize the ~0.35 us per-grid-step overhead and the per-step
        MXU weight re-push at large batch,
      * an even grid keeps v7x's two TensorCores balanced under
        dimension_semantics=("parallel",) (no-op on v5e/v6e, 1 TC).
    """
    B = max(int(B), 1)
    if B <= 16:
        return 16                      # single tile, nothing to balance
    if B <= 32:
        return 16                      # grid = 2
    n = 2                              # smallest even tile count with tile <= 1024 rows
    while _round_up(-(-B // n), 16) > 1024:
        n += 2
    return _round_up(-(-B // n), 16)


def _vmem_cap_bytes():
    """Generation-aware VMEM budget (physical capacity minus headroom)."""
    try:
        cap = int(pltpu.get_tpu_info().vmem_capacity_bytes)  # 128 MiB v5e/v6e, 64 MiB v7x
    except Exception:
        cap = 64 * 1024 * 1024
    return max(cap - 8 * 1024 * 1024, 32 * 1024 * 1024)


def _default_epilogue_dtype():
    """bf16 epilogue on bf16-capable VPUs (v6e/v7x); f32 on v5 (no bf16 VALU)."""
    try:
        kind = jax.devices()[0].device_kind.lower()
    except Exception:
        kind = ""
    return jnp.float32 if "v5" in kind else jnp.bfloat16


def prepare_params(weights, biases, *, compute_dtype=jnp.bfloat16,
                   epilogue_dtype=None):
    """One-time parameter prep (call OUTSIDE the hot forward path).

    * Weights stored (in, out) == transposed PyTorch Linear weight, cast to
      bf16 once (no per-call HBM re-read of f32 weights).
    * Every layer width zero-padded to a multiple of 128 lanes: padded lanes
      stay exactly zero through bias-add + LeakyReLU (bias padded with zeros,
      maximum(0, 0.2*0) == 0) and contribute nothing downstream.
    * Hidden-layer biases in the epilogue dtype; final bias kept in f32.
    """
    if epilogue_dtype is None:
        epilogue_dtype = _default_epilogue_dtype()
    num_layers = len(weights)
    dims = [weights[0].shape[0]] + [w.shape[1] for w in weights]
    pdims = [_round_up(d, 128) for d in dims]

    ws, bs = [], []
    for i, (w, b) in enumerate(zip(weights, biases)):
        w = jnp.asarray(w)
        b = jnp.asarray(b).reshape(1, -1)
        w = jnp.pad(w, ((0, pdims[i] - dims[i]), (0, pdims[i + 1] - dims[i + 1])))
        b = jnp.pad(b, ((0, 0), (0, pdims[i + 1] - dims[i + 1])))
        ws.append(w.astype(compute_dtype))
        bs.append(b.astype(jnp.float32 if i == num_layers - 1 else epilogue_dtype))
    return dict(weights=ws, biases=bs,
                in_dim=dims[0], in_pad=pdims[0],
                num_classes=dims[-1], out_pad=pdims[-1],
                compute_dtype=compute_dtype, epilogue_dtype=epilogue_dtype)


def _mlp_kernel(num_layers, negative_slope, compute_dtype, epilogue_dtype, *refs):
    """Fused MLP forward over one batch tile.

    refs = (x_ref, w0, b0, ..., w{L-1}, b{L-1}, out_ref)
    Matmuls run in bf16 on the MXU with f32 accumulation.  Bias-add +
    LeakyReLU run in `epilogue_dtype` (bf16 on v6e/v7x, f32 on v5e).
    LeakyReLU uses maximum(a, slope*a): mul+max instead of cmp+mul+select.
    """
    x_ref = refs[0]
    out_ref = refs[-1]
    params = refs[1:-1]

    h = x_ref[...]                       # already compute_dtype, lane-dense
    for i in range(num_layers):
        w = params[2 * i][...]           # (in_i_pad, out_i_pad) compute_dtype
        b = params[2 * i + 1][...]       # (1, out_i_pad)
        lhs = h if h.dtype == compute_dtype else h.astype(compute_dtype)
        acc = jnp.dot(lhs, w, preferred_element_type=jnp.float32)
        if i < num_layers - 1:
            a = acc.astype(epilogue_dtype) + b
            h = jnp.maximum(a, negative_slope * a)   # LeakyReLU(0.2)
        else:
            out_ref[...] = (acc + b).astype(out_ref.dtype)   # final bias in f32


def simple_discriminator_forward(x, params, *, block_batch=None,
                                 negative_slope=0.2):
    """x: (B, input_dim) f32/bf16.  Returns (B, num_classes) in bf16."""
    ws, bs = params["weights"], params["biases"]
    num_layers = len(ws)
    in_dim, in_pad = params["in_dim"], params["in_pad"]
    num_classes, out_pad = params["num_classes"], params["out_pad"]
    compute_dtype = params["compute_dtype"]
    epilogue_dtype = params["epilogue_dtype"]

    B = x.shape[0]
    if block_batch is None:
        block_batch = _pick_block_batch(B)
    block_batch = max(16, _round_up(int(block_batch), 16))
    B_pad = _round_up(B, block_batch)
    grid = (B_pad // block_batch,)

    # Activations: single bf16 cast in the wrapper (halves HBM->VMEM DMA) and
    # zero-pad batch rows / input lanes so every tile load is full-lane.
    x_in = x.astype(compute_dtype)
    if B_pad != B or in_pad != in_dim:
        x_in = jnp.pad(x_in, ((0, B_pad - B), (0, in_pad - in_dim)))

    # Specs: activation tiles are pipelined over the batch grid; parameters are
    # grid-invariant untiled VMEM residents (single copy, no double buffering).
    # TODO(synk): verify via pl.lower_as_mlir that untiled VMEM params stay
    # single-buffered, and add an N-tiled-weight (or fp8) fallback if resident
    # params ever outgrow v7x's 64 MiB VMEM.
    in_specs = [pl.BlockSpec((block_batch, in_pad), lambda i: (i, 0))]
    param_spec = pl.BlockSpec(memory_space=pltpu.MemorySpace.VMEM)
    flat_params = []
    for w, b in zip(ws, bs):
        in_specs += [param_spec, param_spec]
        flat_params += [w, b]
    out_spec = pl.BlockSpec((block_batch, out_pad), lambda i: (i, 0))

    itemsize = jnp.dtype(compute_dtype).itemsize
    flops = 2 * B_pad * sum(w.shape[0] * w.shape[1] for w in ws)
    param_bytes = (sum(w.size * w.dtype.itemsize for w in ws)
                   + sum(b.size * b.dtype.itemsize for b in bs))
    bytes_accessed = (param_bytes
                      + B_pad * in_pad * itemsize
                      + B_pad * out_pad * itemsize)
    cost = pl.CostEstimate(flops=flops, transcendentals=0,
                           bytes_accessed=bytes_accessed)

    # VMEM budget: resident params + double-buffered activation tiles + slack
    # for the live f32 accumulator / epilogue intermediates.
    max_width = max([in_pad] + [w.shape[1] for w in ws])
    vmem_need = (param_bytes
                 + 2 * block_batch * (in_pad + out_pad) * itemsize
                 + 3 * block_batch * max_width * 4)
    vmem_limit = int(min(_vmem_cap_bytes(),
                         max(2 * vmem_need, 32 * 1024 * 1024)))

    kernel = functools.partial(_mlp_kernel, num_layers, negative_slope,
                               compute_dtype, epilogue_dtype)

    out = pl.pallas_call(
        kernel,
        out_shape=jax.ShapeDtypeStruct((B_pad, out_pad), compute_dtype),
        grid_spec=pltpu.PrefetchScalarGridSpec(
            num_scalar_prefetch=0,
            grid=grid,
            in_specs=in_specs,
            out_specs=out_spec,
        ),
        compiler_params=pltpu.CompilerParams(
            dimension_semantics=("parallel",),   # batch tiles across TCs (v7x)
            vmem_limit_bytes=vmem_limit,
        ),
        cost_estimate=cost,
    )(x_in, *flat_params)

    return out[:B, :num_classes]


def init_params(key, input_dim, num_classes, num_layers, layer_size):
    """Deterministic synthetic init (PyTorch-like uniform fan-in scaling)."""
    dims = [input_dim] + [layer_size] * (num_layers - 1) + [num_classes]
    weights, biases = [], []
    for i in range(num_layers):
        key, wk, bk = jax.random.split(key, 3)
        bound = 1.0 / float(dims[i]) ** 0.5
        # stored as (in, out) == transposed PyTorch Linear weight
        w = jax.random.uniform(wk, (dims[i], dims[i + 1]),
                               minval=-bound, maxval=bound, dtype=jnp.float32)
        b = jax.random.uniform(bk, (1, dims[i + 1]),
                               minval=-bound, maxval=bound, dtype=jnp.float32)
        weights.append(w)
        biases.append(b)
    return weights, biases


def reference_forward(x, weights, biases, *, compute_dtype=jnp.bfloat16,
                      epilogue_dtype=jnp.float32, negative_slope=0.2):
    """Same math as the kernel: bf16 matmul, f32 accumulation, chosen epilogue."""
    L = len(weights)
    h = x.astype(compute_dtype)
    for i, (w, b) in enumerate(zip(weights, biases)):
        acc = jnp.dot(h.astype(compute_dtype),
                      jnp.asarray(w).astype(compute_dtype),
                      preferred_element_type=jnp.float32)
        b = jnp.asarray(b).reshape(1, -1)
        if i < L - 1:
            a = acc.astype(epilogue_dtype) + b.astype(epilogue_dtype)
            h = jnp.maximum(a, negative_slope * a)
        else:
            h = (acc + b.astype(jnp.float32)).astype(compute_dtype)
    return h


if __name__ == "__main__":
    # Small shapes consistent with the module: x is (batch, input_dim).
    batch = 24           # -> block_batch=16, grid=(2,): exercises the pipeline
    input_dim = 32
    num_classes = 8
    num_layers = 4       # total number of Linear layers
    layer_size = 128

    key = jax.random.PRNGKey(0)
    key, xk = jax.random.split(key)
    x = jax.random.normal(xk, (batch, input_dim), dtype=jnp.float32)

    weights, biases = init_params(key, input_dim, num_classes,
                                  num_layers, layer_size)

    # One-time param prep (bf16 cast + 128-lane padding) outside the hot path.
    params = prepare_params(weights, biases)

    out = simple_discriminator_forward(x, params)
    out = jax.block_until_ready(out)

    ref = reference_forward(x, weights, biases,
                            compute_dtype=params["compute_dtype"],
                            epilogue_dtype=params["epilogue_dtype"])

    assert out.shape == (batch, num_classes), out.shape
    max_err = float(jnp.max(jnp.abs(out.astype(jnp.float32)
                                    - ref.astype(jnp.float32))))
    assert max_err < 5e-2, max_err

    print("KERNEL_OK")
</pallas_src>

<mosaic_0001>
module attributes {stable_mosaic.version = 11 : i64} {
  func.func @_mlp_kernel(%arg0: i32, %arg1: memref<16x128xbf16, #tpu.memory_space<vmem>>, %arg2: memref<128x128xbf16, #tpu.memory_space<vmem>>, %arg3: memref<1x128xbf16, #tpu.memory_space<vmem>>, %arg4: memref<128x128xbf16, #tpu.memory_space<vmem>>, %arg5: memref<1x128xbf16, #tpu.memory_space<vmem>>, %arg6: memref<128x128xbf16, #tpu.memory_space<vmem>>, %arg7: memref<1x128xbf16, #tpu.memory_space<vmem>>, %arg8: memref<128x128xbf16, #tpu.memory_space<vmem>>, %arg9: memref<1x128xf32, #tpu.memory_space<vmem>>, %arg10: memref<16x128xbf16, #tpu.memory_space<vmem>>) attributes {dimension_semantics = [#tpu.dimension_semantics<parallel>], iteration_bounds = array<i64: 2>, scalar_prefetch = 0 : i64, scratch_operands = 0 : i64, tpu.core_type = #tpu.core_type<tc>, window_params = [{transform_indices = @transform_0, window_bounds = array<i64: 16, 128>}, {pipeline_mode = #tpu.pipeline_mode<synchronous>, transform_indices = @transform_1, window_bounds = array<i64: 128, 128>}, {pipeline_mode = #tpu.pipeline_mode<synchronous>, transform_indices = @transform_2, window_bounds = array<i64: 1, 128>}, {pipeline_mode = #tpu.pipeline_mode<synchronous>, transform_indices = @transform_3, window_bounds = array<i64: 128, 128>}, {pipeline_mode = #tpu.pipeline_mode<synchronous>, transform_indices = @transform_4, window_bounds = array<i64: 1, 128>}, {pipeline_mode = #tpu.pipeline_mode<synchronous>, transform_indices = @transform_5, window_bounds = array<i64: 128, 128>}, {pipeline_mode = #tpu.pipeline_mode<synchronous>, transform_indices = @transform_6, window_bounds = array<i64: 1, 128>}, {pipeline_mode = #tpu.pipeline_mode<synchronous>, transform_indices = @transform_7, window_bounds = array<i64: 128, 128>}, {pipeline_mode = #tpu.pipeline_mode<synchronous>, transform_indices = @transform_8, window_bounds = array<i64: 1, 128>}, {transform_indices = @transform_9, window_bounds = array<i64: 16, 128>}]} {
    %c0 = arith.constant 0 : index
    %c0_0 = arith.constant 0 : index
    %0 = vector.load %arg1[%c0, %c0_0] : memref<16x128xbf16, #tpu.memory_space<vmem>>, vector<16x128xbf16>
    %c0_1 = arith.constant 0 : index
    %c0_2 = arith.constant 0 : index
    %1 = vector.load %arg2[%c0_1, %c0_2] : memref<128x128xbf16, #tpu.memory_space<vmem>>, vector<128x128xbf16>
    %c0_3 = arith.constant 0 : index
    %c0_4 = arith.constant 0 : index
    %2 = vector.load %arg3[%c0_3, %c0_4] : memref<1x128xbf16, #tpu.memory_space<vmem>>, vector<1x128xbf16>
    %cst = arith.constant dense<0.000000e+00> : vector<16x128xf32>
    %3 = tpu.matmul %0, %1, %cst {dimension_numbers = #tpu.dot_dimension_numbers<[1], [0], [0], [1], [0, 0, 1, 1], [], []>} : vector<16x128xbf16>, vector<128x128xbf16>, vector<16x128xf32> -> vector<16x128xf32>
    %4 = arith.truncf %3 : vector<16x128xf32> to vector<16x128xbf16>
    %5 = vector.broadcast %2 : vector<1x128xbf16> to vector<16x128xbf16>
    %6 = arith.addf %4, %5 : vector<16x128xbf16>
    %cst_5 = arith.constant 2.001950e-01 : bf16
    %7 = vector.broadcast %cst_5 : bf16 to vector<16x128xbf16>
    %8 = arith.mulf %7, %6 : vector<16x128xbf16>
    %9 = arith.maximumf %6, %8 : vector<16x128xbf16>
    %c0_6 = arith.constant 0 : index
    %c0_7 = arith.constant 0 : index
    %10 = vector.load %arg4[%c0_6, %c0_7] : memref<128x128xbf16, #tpu.memory_space<vmem>>, vector<128x128xbf16>
    %c0_8 = arith.constant 0 : index
    %c0_9 = arith.constant 0 : index
    %11 = vector.load %arg5[%c0_8, %c0_9] : memref<1x128xbf16, #tpu.memory_space<vmem>>, vector<1x128xbf16>
    %cst_10 = arith.constant dense<0.000000e+00> : vector<16x128xf32>
    %12 = tpu.matmul %9, %10, %cst_10 {dimension_numbers = #tpu.dot_dimension_numbers<[1], [0], [0], [1], [0, 0, 1, 1], [], []>} : vector<16x128xbf16>, vector<128x128xbf16>, vector<16x128xf32> -> vector<16x128xf32>
    %13 = arith.truncf %12 : vector<16x128xf32> to vector<16x128xbf16>
    %14 = vector.broadcast %11 : vector<1x128xbf16> to vector<16x128xbf16>
    %15 = arith.addf %13, %14 : vector<16x128xbf16>
    %cst_11 = arith.constant 2.001950e-01 : bf16
    %16 = vector.broadcast %cst_11 : bf16 to vector<16x128xbf16>
    %17 = arith.mulf %16, %15 : vector<16x128xbf16>
    %18 = arith.maximumf %15, %17 : vector<16x128xbf16>
    %c0_12 = arith.constant 0 : index
    %c0_13 = arith.constant 0 : index
    %19 = vector.load %arg6[%c0_12, %c0_13] : memref<128x128xbf16, #tpu.memory_space<vmem>>, vector<128x128xbf16>
    %c0_14 = arith.constant 0 : index
    %c0_15 = arith.constant 0 : index
    %20 = vector.load %arg7[%c0_14, %c0_15] : memref<1x128xbf16, #tpu.memory_space<vmem>>, vector<1x128xbf16>
    %cst_16 = arith.constant dense<0.000000e+00> : vector<16x128xf32>
    %21 = tpu.matmul %18, %19, %cst_16 {dimension_numbers = #tpu.dot_dimension_numbers<[1], [0], [0], [1], [0, 0, 1, 1], [], []>} : vector<16x128xbf16>, vector<128x128xbf16>, vector<16x128xf32> -> vector<16x128xf32>
    %22 = arith.truncf %21 : vector<16x128xf32> to vector<16x128xbf16>
    %23 = vector.broadcast %20 : vector<1x128xbf16> to vector<16x128xbf16>
    %24 = arith.addf %22, %23 : vector<16x128xbf16>
    %cst_17 = arith.constant 2.001950e-01 : bf16
    %25 = vector.broadcast %cst_17 : bf16 to vector<16x128xbf16>
    %26 = arith.mulf %25, %24 : vector<16x128xbf16>
    %27 = arith.maximumf %24, %26 : vector<16x128xbf16>
    %c0_18 = arith.constant 0 : index
    %c0_19 = arith.constant 0 : index
    %28 = vector.load %arg8[%c0_18, %c0_19] : memref<128x128xbf16, #tpu.memory_space<vmem>>, vector<128x128xbf16>
    %c0_20 = arith.constant 0 : index
    %c0_21 = arith.constant 0 : index
    %29 = vector.load %arg9[%c0_20, %c0_21] : memref<1x128xf32, #tpu.memory_space<vmem>>, vector<1x128xf32>
    %cst_22 = arith.constant dense<0.000000e+00> : vector<16x128xf32>
    %30 = tpu.matmul %27, %28, %cst_22 {dimension_numbers = #tpu.dot_dimension_numbers<[1], [0], [0], [1], [0, 0, 1, 1], [], []>} : vector<16x128xbf16>, vector<128x128xbf16>, vector<16x128xf32> -> vector<16x128xf32>
    %31 = vector.broadcast %29 : vector<1x128xf32> to vector<16x128xf32>
    %32 = arith.addf %30, %31 : vector<16x128xf32>
    %33 = arith.truncf %32 : vector<16x128xf32> to vector<16x128xbf16>
    %c0_23 = arith.constant 0 : index
    %c0_24 = arith.constant 0 : index
    %34 = vector.load %arg10[%c0_23, %c0_24] : memref<16x128xbf16, #tpu.memory_space<vmem>>, vector<16x128xbf16>
    tpu.vector_store %arg10[%c0_23, %c0_24], %33 {strides = array<i32>} : memref<16x128xbf16, #tpu.memory_space<vmem>>, vector<16x128xbf16>,
    return
  }
  func.func @transform_0(%arg0: i32) -> (i32, i32) {
    %c0_i32 = arith.constant 0 : i32
    %c0_i32_0 = arith.constant 0 : i32
    return %arg0, %c0_i32 : i32, i32
  }
  func.func @transform_1(%arg0: i32) -> (i32, i32) {
    %c0_i32 = arith.constant 0 : i32
    %c0_i32_0 = arith.constant 0 : i32
    %c0_i32_1 = arith.constant 0 : i32
    return %c0_i32, %c0_i32_0 : i32, i32
  }
  func.func @transform_2(%arg0: i32) -> (i32, i32) {
    %c0_i32 = arith.constant 0 : i32
    %c0_i32_0 = arith.constant 0 : i32
    %c0_i32_1 = arith.constant 0 : i32
    return %c0_i32, %c0_i32_0 : i32, i32
  }
  func.func @transform_3(%arg0: i32) -> (i32, i32) {
    %c0_i32 = arith.constant 0 : i32
    %c0_i32_0 = arith.constant 0 : i32
    %c0_i32_1 = arith.constant 0 : i32
    return %c0_i32, %c0_i32_0 : i32, i32
  }
  func.func @transform_4(%arg0: i32) -> (i32, i32) {
    %c0_i32 = arith.constant 0 : i32
    %c0_i32_0 = arith.constant 0 : i32
    %c0_i32_1 = arith.constant 0 : i32
    return %c0_i32, %c0_i32_0 : i32, i32
  }
  func.func @transform_5(%arg0: i32) -> (i32, i32) {
    %c0_i32 = arith.constant 0 : i32
    %c0_i32_0 = arith.constant 0 : i32
    %c0_i32_1 = arith.constant 0 : i32
    return %c0_i32, %c0_i32_0 : i32, i32
  }
  func.func @transform_6(%arg0: i32) -> (i32, i32) {
    %c0_i32 = arith.constant 0 : i32
    %c0_i32_0 = arith.constant 0 : i32
    %c0_i32_1 = arith.constant 0 : i32
    return %c0_i32, %c0_i32_0 : i32, i32
  }
  func.func @transform_7(%arg0: i32) -> (i32, i32) {
    %c0_i32 = arith.constant 0 : i32
    %c0_i32_0 = arith.constant 0 : i32
    %c0_i32_1 = arith.constant 0 : i32
    return %c0_i32, %c0_i32_0 : i32, i32
  }
  func.func @transform_8(%arg0: i32) -> (i32, i32) {
    %c0_i32 = arith.constant 0 : i32
    %c0_i32_0 = arith.constant 0 : i32
    %c0_i32_1 = arith.constant 0 : i32
    return %c0_i32, %c0_i32_0 : i32, i32
  }
  func.func @transform_9(%arg0: i32) -> (i32, i32) {
    %c0_i32 = arith.constant 0 : i32
    %c0_i32_0 = arith.constant 0 : i32
    return %arg0, %c0_i32 : i32, i32
  }
}

</mosaic_0001>

<llo_original>
// kernel: tpu_custom_call.1
$region0: #{tpu_custom_call.1}
  #allocation0 [shape = 'u32[]', space=smem, size = 0x4, offset = 0x4, fixed_abs, tag = 'smem constant byte address 0x4 - core index']
  #allocation1 [shape = 'u32[144,128]{1,0:T(1,128)}', space=vmem, size = 0x12000, scoped, tag = 'internal scratch']
  %s0 = inlined_call_operand.hbm [shape: bf16[32,128], index: 0, kind: input, shape index: {}]
  %s1 = inlined_call_operand.hbm [shape: bf16[128,128], index: 1, kind: input, shape index: {}]
  %s2 = inlined_call_operand.vmem [shape: bf16[1,128], index: 2, kind: input, shape index: {}]
  %s3 = inlined_call_operand.hbm [shape: bf16[128,128], index: 3, kind: input, shape index: {}]
  %s4 = inlined_call_operand.vmem [shape: bf16[1,128], index: 4, kind: input, shape index: {}]
  %s5 = inlined_call_operand.hbm [shape: bf16[128,128], index: 5, kind: input, shape index: {}]
  %s6 = inlined_call_operand.vmem [shape: bf16[1,128], index: 6, kind: input, shape index: {}]
  %s7 = inlined_call_operand.hbm [shape: bf16[128,128], index: 7, kind: input, shape index: {}]
  %s8 = inlined_call_operand.vmem [shape: f32[1,128], index: 8, kind: input, shape index: {}]
  %s9 = inlined_call_operand.hbm [shape: bf16[32,128], index: 9, kind: output, shape index: {}]
  %s10 = sld [smem:[#allocation0]]
  $region89: #{tpu_custom_call.1} parent=0
    _
  %s12 = ssub.s32 1, %s10
  %s13 = scalar_select 0, %s12, %s10
  $region1: #{tpu_custom_call.1} parent=0
    #allocation2 [shape = 'u8[8192]{0}', space=vmem, size = 0x2000, scoped, tag = 'input window, operand 0']
    #allocation3 [shape = 's32[2]{0}', space=sflag, size = 0x8, scoped, tag = 'scoped memory for tpu_custom_call.1']
    #allocation4 [shape = 's32[2]{0}', space=sflag, size = 0x8, scoped, tag = 'scoped memory for tpu_custom_call.1']
    #allocation5 [shape = 'u8[32768]{0}', space=vmem, size = 0x8000, scoped, tag = 'input window, operand 1, single buffered']
    #allocation6 [shape = 's32[1]{0}', space=sflag, size = 0x4, scoped, tag = 'scoped memory for tpu_custom_call.1']
    #allocation7 [shape = 'u8[32768]{0}', space=vmem, size = 0x8000, scoped, tag = 'input window, operand 3, single buffered']
    #allocation8 [shape = 'u8[32768]{0}', space=vmem, size = 0x8000, scoped, tag = 'input window, operand 5, single buffered']
    #allocation9 [shape = 's32[1]{0}', space=sflag, size = 0x4, scoped, tag = 'scoped memory for tpu_custom_call.1']
    #allocation10 [shape = 'u8[32768]{0}', space=vmem, size = 0x8000, scoped, tag = 'input window, operand 7, single buffered']
    #allocation11 [shape = 'u8[8192]{0}', space=vmem, size = 0x2000, scoped, tag = 'output window, operand 0']
    %14 = vsyncpa [#allocation3], 0
    %s15 = scalar_lea.sflag [#allocation3], 1
    %16 = vsyncpa %s15, 0
    %17 = vsyncpa [#allocation6], 0
    %18 = vsyncpa [#allocation9], 0
    %19 = vsyncpa [#allocation4], 0
    %s20 = scalar_lea.sflag [#allocation4], 1
    %21 = vsyncpa %s20, 0
    loop: start=0, step=1, limit=4
    $region2: #{tpu_custom_call.1} parent=1 // loop_pre_header
      _
    $region3: #{tpu_custom_call.1} parent=1 // loop_header
      %s23 = sphi 0, %s27
      %p24 = scmp.ge.s32.totalorder %s23, 4
      %s33 = sphi 0, %s35
      %s36 = sphi 0, %s33
      %s37 = sphi 0, %s36
      %s53 = sphi 0, %s37
      %s57 = sphi 0, %s57
      %s59 = sphi 0, %s57
      %s60 = sphi 0, %s59
      %s74 = sphi 0, %s60
      %s78 = sphi 0, %s78
      %s80 = sphi 0, %s78
      %s81 = sphi 0, %s80
      %s95 = sphi 0, %s81
      %s99 = sphi 0, %s99
      %s101 = sphi 0, %s99
      %s102 = sphi 0, %s101
      %s116 = sphi 0, %s102
      %s120 = sphi 0, %s120
      %s122 = sphi 0, %s120
      %s123 = sphi 0, %s122
      %s137 = sphi 0, %s123
      %s141 = sphi 0, %s141
      %s143 = sphi 0, %s141
      %s144 = sphi 0, %s143
      %s158 = sphi 0, %s144
      %s162 = sphi 0, %s162
      %s164 = sphi 0, %s162
      %s165 = sphi 0, %s164
      %s179 = sphi 0, %s165
      %s183 = sphi 0, %s183
      %s185 = sphi 0, %s183
      %s186 = sphi 0, %s185
      %s200 = sphi 0, %s186
      %s204 = sphi 0, %s204
      %s206 = sphi 0, %s204
      %s207 = sphi 0, %s206
      %s221 = sphi 0, %s207
      %s227 = sphi 0, %s229
      %s230 = sphi 0, %s227
      %s231 = sphi 0, %s230
      %s247 = sphi 0, %s231
    $region4: #{tpu_custom_call.1} parent=1 // loop_header_branch
      %26 = sbr.rel (%p24) target = $region8
    $region5: #{tpu_custom_call.1} parent=1 // loop_body
      %s28 = ssub.s32 %s23, 1
      %s29 = ssub.s32 %s23, 2
      %s30 = sadd.s32 %s23, 1
      %s31 = ssub.s32 %s23, %s30
      %p32 = scmp.eq.s32.totalorder %s31, 0
      %s34 = sadd.s32 %s33, 1
      %s35 = scalar_select %p32, %s33, %s34
      %p38 = pneg %p32
      %p39 = scmp.eq.s32.totalorder %s23, 1
      %p40 = por %p38, %p39
      %p41 = scmp.ne.s32.totalorder %s33, %s36
      %p42 = scmp.eq.s32.totalorder %s23, 0
      %p43 = por %p41, %p42
      %p44 = scmp.ne.s32.totalorder %s33, %s36
      %p45 = scmp.eq.s32.totalorder %s28, 1
      %p46 = por %p44, %p45
      %p47 = scmp.ne.s32.totalorder %s36, %s37
      %p48 = scmp.eq.s32.totalorder %s28, 0
      %p49 = por %p47, %p48
      %p50 = scmp.ne.s32.totalorder %s36, %s37
      %p51 = scmp.eq.s32.totalorder %s29, 1
      %p52 = por %p50, %p51
      %p54 = scmp.ne.s32.totalorder %s37, %s53
      %p55 = scmp.eq.s32.totalorder %s29, 0
      %p56 = por %p54, %p55
      %s58 = sadd.s32 %s57, 1
      %p61 = scmp.eq.s32.totalorder %s23, 1
      %p62 = scmp.ne.s32.totalorder %s57, %s59
      %p63 = scmp.eq.s32.totalorder %s23, 0
      %p64 = por %p62, %p63
      %p65 = scmp.ne.s32.totalorder %s57, %s59
      %p66 = scmp.eq.s32.totalorder %s28, 1
      %p67 = por %p65, %p66
      %p68 = scmp.ne.s32.totalorder %s59, %s60
      %p69 = scmp.eq.s32.totalorder %s28, 0
      %p70 = por %p68, %p69
      %p71 = scmp.ne.s32.totalorder %s59, %s60
      %p72 = scmp.eq.s32.totalorder %s29, 1
      %p73 = por %p71, %p72
      %p75 = scmp.ne.s32.totalorder %s60, %s74
      %p76 = scmp.eq.s32.totalorder %s29, 0
      %p77 = por %p75, %p76
      %s79 = sadd.s32 %s78, 1
      %p82 = scmp.eq.s32.totalorder %s23, 1
      %p83 = scmp.ne.s32.totalorder %s78, %s80
      %p84 = scmp.eq.s32.totalorder %s23, 0
      %p85 = por %p83, %p84
      %p86 = scmp.ne.s32.totalorder %s78, %s80
      %p87 = scmp.eq.s32.totalorder %s28, 1
      %p88 = por %p86, %p87
      %p89 = scmp.ne.s32.totalorder %s80, %s81
      %p90 = scmp.eq.s32.totalorder %s28, 0
      %p91 = por %p89, %p90
      %p92 = scmp.ne.s32.totalorder %s80, %s81
      %p93 = scmp.eq.s32.totalorder %s29, 1
      %p94 = por %p92, %p93
      %p96 = scmp.ne.s32.totalorder %s81, %s95
      %p97 = scmp.eq.s32.totalorder %s29, 0
      %p98 = por %p96, %p97
      %s100 = sadd.s32 %s99, 1
      %p103 = scmp.eq.s32.totalorder %s23, 1
      %p104 = scmp.ne.s32.totalorder %s99, %s101
      %p105 = scmp.eq.s32.totalorder %s23, 0
      %p106 = por %p104, %p105
      %p107 = scmp.ne.s32.totalorder %s99, %s101
      %p108 = scmp.eq.s32.totalorder %s28, 1
      %p109 = por %p107, %p108
      %p110 = scmp.ne.s32.totalorder %s101, %s102
      %p111 = scmp.eq.s32.totalorder %s28, 0
      %p112 = por %p110, %p111
      %p113 = scmp.ne.s32.totalorder %s101, %s102
      %p114 = scmp.eq.s32.totalorder %s29, 1
      %p115 = por %p113, %p114
      %p117 = scmp.ne.s32.totalorder %s102, %s116
      %p118 = scmp.eq.s32.totalorder %s29, 0
      %p119 = por %p117, %p118
      %s121 = sadd.s32 %s120, 1
      %p124 = scmp.eq.s32.totalorder %s23, 1
      %p125 = scmp.ne.s32.totalorder %s120, %s122
      %p126 = scmp.eq.s32.totalorder %s23, 0
      %p127 = por %p125, %p126
      %p128 = scmp.ne.s32.totalorder %s120, %s122
      %p129 = scmp.eq.s32.totalorder %s28, 1
      %p130 = por %p128, %p129
      %p131 = scmp.ne.s32.totalorder %s122, %s123
      %p132 = scmp.eq.s32.totalorder %s28, 0
      %p133 = por %p131, %p132
      %p134 = scmp.ne.s32.totalorder %s122, %s123
      %p135 = scmp.eq.s32.totalorder %s29, 1
      %p136 = por %p134, %p135
      %p138 = scmp.ne.s32.totalorder %s123, %s137
      %p139 = scmp.eq.s32.totalorder %s29, 0
      %p140 = por %p138, %p139
      %s142 = sadd.s32 %s141, 1
      %p145 = scmp.eq.s32.totalorder %s23, 1
      %p146 = scmp.ne.s32.totalorder %s141, %s143
      %p147 = scmp.eq.s32.totalorder %s23, 0
      %p148 = por %p146, %p147
      %p149 = scmp.ne.s32.totalorder %s141, %s143
      %p150 = scmp.eq.s32.totalorder %s28, 1
      %p151 = por %p149, %p150
      %p152 = scmp.ne.s32.totalorder %s143, %s144
      %p153 = scmp.eq.s32.totalorder %s28, 0
      %p154 = por %p152, %p153
      %p155 = scmp.ne.s32.totalorder %s143, %s144
      %p156 = scmp.eq.s32.totalorder %s29, 1
      %p157 = por %p155, %p156
      %p159 = scmp.ne.s32.totalorder %s144, %s158
      %p160 = scmp.eq.s32.totalorder %s29, 0
      %p161 = por %p159, %p160
      %s163 = sadd.s32 %s162, 1
      %p166 = scmp.eq.s32.totalorder %s23, 1
      %p167 = scmp.ne.s32.totalorder %s162, %s164
      %p168 = scmp.eq.s32.totalorder %s23, 0
      %p169 = por %p167, %p168
      %p170 = scmp.ne.s32.totalorder %s162, %s164
      %p171 = scmp.eq.s32.totalorder %s28, 1
      %p172 = por %p170, %p171
      %p173 = scmp.ne.s32.totalorder %s164, %s165
      %p174 = scmp.eq.s32.totalorder %s28, 0
      %p175 = por %p173, %p174
      %p176 = scmp.ne.s32.totalorder %s164, %s165
      %p177 = scmp.eq.s32.totalorder %s29, 1
      %p178 = por %p176, %p177
      %p180 = scmp.ne.s32.totalorder %s165, %s179
      %p181 = scmp.eq.s32.totalorder %s29, 0
      %p182 = por %p180, %p181
      %s184 = sadd.s32 %s183, 1
      %p187 = scmp.eq.s32.totalorder %s23, 1
      %p188 = scmp.ne.s32.totalorder %s183, %s185
      %p189 = scmp.eq.s32.totalorder %s23, 0
      %p190 = por %p188, %p189
      %p191 = scmp.ne.s32.totalorder %s183, %s185
      %p192 = scmp.eq.s32.totalorder %s28, 1
      %p193 = por %p191, %p192
      %p194 = scmp.ne.s32.totalorder %s185, %s186
      %p195 = scmp.eq.s32.totalorder %s28, 0
      %p196 = por %p194, %p195
      %p197 = scmp.ne.s32.totalorder %s185, %s186
      %p198 = scmp.eq.s32.totalorder %s29, 1
      %p199 = por %p197, %p198
      %p201 = scmp.ne.s32.totalorder %s186, %s200
      %p202 = scmp.eq.s32.totalorder %s29, 0
      %p203 = por %p201, %p202
      %s205 = sadd.s32 %s204, 1
      %p208 = scmp.eq.s32.totalorder %s23, 1
      %p209 = scmp.ne.s32.totalorder %s204, %s206
      %p210 = scmp.eq.s32.totalorder %s23, 0
      %p211 = por %p209, %p210
      %p212 = scmp.ne.s32.totalorder %s204, %s206
      %p213 = scmp.eq.s32.totalorder %s28, 1
      %p214 = por %p212, %p213
      %p215 = scmp.ne.s32.totalorder %s206, %s207
      %p216 = scmp.eq.s32.totalorder %s28, 0
      %p217 = por %p215, %p216
      %p218 = scmp.ne.s32.totalorder %s206, %s207
      %p219 = scmp.eq.s32.totalorder %s29, 1
      %p220 = por %p218, %p219
      %p222 = scmp.ne.s32.totalorder %s207, %s221
      %p223 = scmp.eq.s32.totalorder %s29, 0
      %p224 = por %p222, %p223
      %s225 = ssub.s32 %s23, %s30
      %p226 = scmp.eq.s32.totalorder %s225, 0
      %s228 = sadd.s32 %s227, 1
      %s229 = scalar_select %p226, %s227, %s228
      %p232 = pneg %p226
      %p233 = scmp.eq.s32.totalorder %s23, 1
      %p234 = por %p232, %p233
      %p235 = scmp.ne.s32.totalorder %s227, %s230
      %p236 = scmp.eq.s32.totalorder %s23, 0
      %p237 = por %p235, %p236
      %p238 = scmp.ne.s32.totalorder %s227, %s230
      %p239 = scmp.eq.s32.totalorder %s28, 1
      %p240 = por %p238, %p239
      %p241 = scmp.ne.s32.totalorder %s230, %s231
      %p242 = scmp.eq.s32.totalorder %s28, 0
      %p243 = por %p241, %p242
      %p244 = scmp.ne.s32.totalorder %s230, %s231
      %p245 = scmp.eq.s32.totalorder %s29, 1
      %p246 = por %p244, %p245
      %p248 = scmp.ne.s32.totalorder %s231, %s247
      %p249 = scmp.eq.s32.totalorder %s29, 0
      %p250 = por %p248, %p249
      %p251 = scmp.le.s32.totalorder 1, %s23
      %p252 = scmp.lt.s32.totalorder %s23, 3
      %p253 = pnand %p251, %p252
      %p254 = pneg %p253
      // Predicated region
      $region9: #{tpu_custom_call.1} parent=5 // pred_check
        _
      $region10: #{tpu_custom_call.1} parent=5 // pred_check_branch
        %256 = sbr.rel (%p253) target = $region12
      $region11: #{tpu_custom_call.1} parent=5 // pred_region
        %s257 = ssub.s32 %s23, 1
        // Predicated region
        $region13: #{tpu_custom_call.1} parent=11 // pred_check
          %p258 = pneg %p70
        $region14: #{tpu_custom_call.1} parent=11 // pred_check_branch
          %260 = sbr.rel (%p258) target = $region16
        $region15: #{tpu_custom_call.1} parent=11 // pred_region
          %s262 = ssub.s32 1024, 1024
          %263 = vsyncadd [#allocation6], %s262
          %s264 = sshll.u32 [#allocation5], 4
          %s265 = int_to_ptr.vmem [resolvable:$true] %s264
          %270 = dma.hbm_to_vmem [thread:$0]  %s1, 1024, %s265, [#allocation6], 64, 64, 4
        $region16: #{tpu_custom_call.1} parent=11 // pred_fallthru
          _
        // Predicated region
        $region17: #{tpu_custom_call.1} parent=11 // pred_check
          %p271 = pneg %p91
        $region18: #{tpu_custom_call.1} parent=11 // pred_check_branch
          %273 = sbr.rel (%p271) target = $region20
        $region19: #{tpu_custom_call.1} parent=11 // pred_region
          _
        $region20: #{tpu_custom_call.1} parent=11 // pred_fallthru
          _
        // Predicated region
        $region21: #{tpu_custom_call.1} parent=11 // pred_check
          %p274 = pneg %p112
        $region22: #{tpu_custom_call.1} parent=11 // pred_check_branch
          %276 = sbr.rel (%p274) target = $region24
        $region23: #{tpu_custom_call.1} parent=11 // pred_region
          %s278 = ssub.s32 1024, 1024
          %279 = vsyncadd [#allocation6], %s278
          %s280 = sshll.u32 [#allocation7], 4
          %s281 = int_to_ptr.vmem [resolvable:$true] %s280
          %286 = dma.hbm_to_vmem [thread:$0]  %s3, 1024, %s281, [#allocation6], 64, 64, 4
        $region24: #{tpu_custom_call.1} parent=11 // pred_fallthru
          _
        // Predicated region
        $region25: #{tpu_custom_call.1} parent=11 // pred_check
          %p287 = pneg %p133
        $region26: #{tpu_custom_call.1} parent=11 // pred_check_branch
          %289 = sbr.rel (%p287) target = $region28
        $region27: #{tpu_custom_call.1} parent=11 // pred_region
          _
        $region28: #{tpu_custom_call.1} parent=11 // pred_fallthru
          _
        // Predicated region
        $region29: #{tpu_custom_call.1} parent=11 // pred_check
          %p290 = pneg %p154
        $region30: #{tpu_custom_call.1} parent=11 // pred_check_branch
          %292 = sbr.rel (%p290) target = $region32
        $region31: #{tpu_custom_call.1} parent=11 // pred_region
          %s294 = ssub.s32 1024, 1024
          %295 = vsyncadd [#allocation9], %s294
          %s296 = sshll.u32 [#allocation8], 4
          %s297 = int_to_ptr.vmem [resolvable:$true] %s296
          %302 = dma.hbm_to_vmem [thread:$0]  %s5, 1024, %s297, [#allocation9], 64, 64, 4
        $region32: #{tpu_custom_call.1} parent=11 // pred_fallthru
          _
        // Predicated region
        $region33: #{tpu_custom_call.1} parent=11 // pred_check
          %p303 = pneg %p175
        $region34: #{tpu_custom_call.1} parent=11 // pred_check_branch
          %305 = sbr.rel (%p303) target = $region36
        $region35: #{tpu_custom_call.1} parent=11 // pred_region
          _
        $region36: #{tpu_custom_call.1} parent=11 // pred_fallthru
          _
        // Predicated region
        $region37: #{tpu_custom_call.1} parent=11 // pred_check
          %p306 = pneg %p196
        $region38: #{tpu_custom_call.1} parent=11 // pred_check_branch
          %308 = sbr.rel (%p306) target = $region40
        $region39: #{tpu_custom_call.1} parent=11 // pred_region
          %s310 = ssub.s32 1024, 1024
          %311 = vsyncadd [#allocation9], %s310
          %s312 = sshll.u32 [#allocation10], 4
          %s313 = int_to_ptr.vmem [resolvable:$true] %s312
          %318 = dma.hbm_to_vmem [thread:$0]  %s7, 1024, %s313, [#allocation9], 64, 64, 4
        $region40: #{tpu_custom_call.1} parent=11 // pred_fallthru
          _
        // Predicated region
        $region41: #{tpu_custom_call.1} parent=11 // pred_check
          %p319 = pneg %p217
        $region42: #{tpu_custom_call.1} parent=11 // pred_check_branch
          %321 = sbr.rel (%p319) target = $region44
        $region43: #{tpu_custom_call.1} parent=11 // pred_region
          _
        $region44: #{tpu_custom_call.1} parent=11 // pred_fallthru
          _
      $region12: #{tpu_custom_call.1} parent=5 // pred_fallthru
        _
      %p322 = scmp.lt.s32.totalorder %s23, 2
      // Predicated region
      $region45: #{tpu_custom_call.1} parent=5 // pred_check
        %p323 = pneg %p322
      $region46: #{tpu_custom_call.1} parent=5 // pred_check_branch
        %325 = sbr.rel (%p323) target = $region48
      $region47: #{tpu_custom_call.1} parent=5 // pred_region
        // Predicated region
        $region49: #{tpu_custom_call.1} parent=47 // pred_check
          %p326 = pneg %p43
        $region50: #{tpu_custom_call.1} parent=47 // pred_check_branch
          %328 = sbr.rel (%p326) target = $region52
        $region51: #{tpu_custom_call.1} parent=47 // pred_region
          %s329 = sand.u32 %s33, 1
          %s330 = scalar_lea.sflag [#allocation3], %s329
          %s331 = sand.u32 %s33, 1
          %s332 = smul.addr %s331, 8
          %s333 = scalar_lea.vmem [#allocation2], %s332
          %s334 = smul.u32 2, %s23
          %s336 = ssub.s32 128, 128
          %337 = vsyncadd %s330, %s336
          %s338 = smul.addr %s334, 64
          %s339 = scalar_lea.hbm %s0, %s338
          %s340 = sshll.u32 %s333, 4
          %s341 = int_to_ptr.vmem [resolvable:$true] %s340
          %346 = dma.hbm_to_vmem [thread:$0]  %s339, 128, %s341, %s330, 64, 64, 4
        $region52: #{tpu_custom_call.1} parent=47 // pred_fallthru
          _
      $region48: #{tpu_custom_call.1} parent=5 // pred_fallthru
        _
      %p347 = scmp.le.s32.totalorder 1, %s23
      %p348 = scmp.lt.s32.totalorder %s23, 3
      %p349 = pnand %p347, %p348
      %p350 = pneg %p349
      // Predicated region
      $region53: #{tpu_custom_call.1} parent=5 // pred_check
        _
      $region54: #{tpu_custom_call.1} parent=5 // pred_check_branch
        %352 = sbr.rel (%p349) target = $region56
      $region55: #{tpu_custom_call.1} parent=5 // pred_region
        %s353 = ssub.s32 %s23, 1
        %s354 = sand.u32 %s36, 1
        %s355 = scalar_lea.sflag [#allocation3], %s354
        %s356 = sand.u32 %s36, 1
        %s357 = smul.addr %s356, 8
        %s358 = scalar_lea.vmem [#allocation2], %s357
        // Predicated region
        $region57: #{tpu_custom_call.1} parent=55 // pred_check
          %p359 = pneg %p49
        $region58: #{tpu_custom_call.1} parent=55 // pred_check_branch
          %361 = sbr.rel (%p359) target = $region60
        $region59: #{tpu_custom_call.1} parent=55 // pred_region
          %362 = dma.done %s355, 128
        $region60: #{tpu_custom_call.1} parent=55 // pred_fallthru
          _
        // Predicated region
        $region61: #{tpu_custom_call.1} parent=55 // pred_check
          %p363 = pneg %p70
        $region62: #{tpu_custom_call.1} parent=55 // pred_check_branch
          %365 = sbr.rel (%p363) target = $region64
        $region63: #{tpu_custom_call.1} parent=55 // pred_region
          %366 = dma.done [#allocation6], 1024
        $region64: #{tpu_custom_call.1} parent=55 // pred_fallthru
          _
        // Predicated region
        $region65: #{tpu_custom_call.1} parent=55 // pred_check
          %p367 = pneg %p112
        $region66: #{tpu_custom_call.1} parent=55 // pred_check_branch
          %369 = sbr.rel (%p367) target = $region68
        $region67: #{tpu_custom_call.1} parent=55 // pred_region
          %370 = dma.done [#allocation6], 1024
        $region68: #{tpu_custom_call.1} parent=55 // pred_fallthru
          _
        // Predicated region
        $region69: #{tpu_custom_call.1} parent=55 // pred_check
          %p371 = pneg %p154
        $region70: #{tpu_custom_call.1} parent=55 // pred_check_branch
          %373 = sbr.rel (%p371) target = $region72
        $region71: #{tpu_custom_call.1} parent=55 // pred_region
          %374 = dma.done [#allocation9], 1024
        $region72: #{tpu_custom_call.1} parent=55 // pred_fallthru
          _
        // Predicated region
        $region73: #{tpu_custom_call.1} parent=55 // pred_check
          %p375 = pneg %p196
        $region74: #{tpu_custom_call.1} parent=55 // pred_check_branch
          %377 = sbr.rel (%p375) target = $region76
        $region75: #{tpu_custom_call.1} parent=55 // pred_region
          %378 = dma.done [#allocation9], 1024
        $region76: #{tpu_custom_call.1} parent=55 // pred_fallthru
          _
        %s379 = sand.u32 %s36, 1
        %s380 = scalar_lea.sflag [#allocation3], %s379
        %s381 = sand.u32 %s36, 1
        %s382 = smul.addr %s381, 8
        %s383 = scalar_lea.vmem [#allocation2], %s382
        %p384 = pneg %p49
        %p385 = pneg %p46
        %p386 = pneg %p70
        %p387 = pneg %p67
        %p388 = pneg %p91
        %p389 = pneg %p88
        %p390 = pneg %p112
        %p391 = pneg %p109
        %p392 = pneg %p133
        %p393 = pneg %p130
        %p394 = pneg %p154
        %p395 = pneg %p151
        %p396 = pneg %p175
        %p397 = pneg %p172
        %p398 = pneg %p196
        %p399 = pneg %p193
        %p400 = pneg %p217
        %p401 = pneg %p214
        %p402 = pneg %p243
        %p403 = pneg %p240
        %s404 = sand.u32 %s230, 1
        %s405 = scalar_lea.sflag [#allocation4], %s404
        %s406 = sand.u32 %s230, 1
        %s407 = smul.addr %s406, 8
        %s408 = scalar_lea.vmem [#allocation11], %s407
        %s409 = smul.u32 2, %s28
        %s410 = smul.u32 2, %s28
        %v413 = vld [vmem:[%s358] sm:$0xf]
        %v414 = vld [vmem:[%s358 + $0x4] sm:$0xf]
        %v415 = vld [vmem:[#allocation5] sm:$0xf]
        %v416 = vld [vmem:[#allocation5 + $0x4] sm:$0xf]
        %v417 = vld [vmem:[#allocation5 + $0x8] sm:$0xf]
        %v418 = vld [vmem:[#allocation5 + $0xc] sm:$0xf]
        %v419 = vld [vmem:[#allocation5 + $0x10] sm:$0xf]
        %v420 = vld [vmem:[#allocation5 + $0x14] sm:$0xf]
        %v421 = vld [vmem:[#allocation5 + $0x18] sm:$0xf]
        %v422 = vld [vmem:[#allocation5 + $0x1c] sm:$0xf]
        %v423 = vld [vmem:[#allocation5 + $0x20] sm:$0xf]
        %v424 = vld [vmem:[#allocation5 + $0x24] sm:$0xf]
        %v425 = vld [vmem:[#allocation5 + $0x28] sm:$0xf]
        %v426 = vld [vmem:[#allocation5 + $0x2c] sm:$0xf]
        %v427 = vld [vmem:[#allocation5 + $0x30] sm:$0xf]
        %v428 = vld [vmem:[#allocation5 + $0x34] sm:$0xf]
        %v429 = vld [vmem:[#allocation5 + $0x38] sm:$0xf]
        %v430 = vld [vmem:[#allocation5 + $0x3c] sm:$0xf]
        %v431 = vld [vmem:[%s2] sm:$0x1]
        %v434 = vunpack.c.l.b16 %v413
        %v435 = vunpack.c.l.b16 %v414
        %v436 = vpack.c.b16 %v435, %v434
        %v454 = vunpack.c.l.b16 %v415
        %v455 = vunpack.c.l.b16 %v416
        %v456 = vunpack.c.l.b16 %v417
        %v457 = vunpack.c.l.b16 %v418
        %v458 = vunpack.c.l.b16 %v419
        %v459 = vunpack.c.l.b16 %v420
        %v460 = vunpack.c.l.b16 %v421
        %v461 = vunpack.c.l.b16 %v422
        %v462 = vunpack.c.l.b16 %v423
        %v463 = vunpack.c.l.b16 %v424
        %v464 = vunpack.c.l.b16 %v425
        %v465 = vunpack.c.l.b16 %v426
        %v466 = vunpack.c.l.b16 %v427
        %v467 = vunpack.c.l.b16 %v428
        %v468 = vunpack.c.l.b16 %v429
        %v469 = vunpack.c.l.b16 %v430
        %v470 = vpack.c.b16 %v455, %v454
        %v471 = vpack.c.b16 %v457, %v456
        %v472 = vpack.c.b16 %v459, %v458
        %v473 = vpack.c.b16 %v461, %v460
        %v474 = vpack.c.b16 %v463, %v462
        %v475 = vpack.c.b16 %v465, %v464
        %v476 = vpack.c.b16 %v467, %v466
        %v477 = vpack.c.b16 %v469, %v468
        %486 = vmatprep.subr.bf16.mxu0 0
        %487 = vmatpush1.bf16.msra.mxu0 %v470
        %488 = vmatprep.subr.bf16.mxu0 0
        %489 = vmatpush1.bf16.msra.mxu0 %v471
        %490 = vmatprep.subr.bf16.mxu0 0
        %491 = vmatpush1.bf16.msra.mxu0 %v472
        %492 = vmatprep.subr.bf16.mxu0 0
        %493 = vmatpush1.bf16.msra.mxu0 %v473
        %494 = vmatprep.subr.bf16.mxu0 0
        %495 = vmatpush1.bf16.msra.mxu0 %v474
        %496 = vmatprep.subr.bf16.mxu0 0
        %497 = vmatpush1.bf16.msra.mxu0 %v475
        %498 = vmatprep.subr.bf16.mxu0 0
        %499 = vmatpush1.bf16.msra.mxu0 %v476
        %500 = vmatprep.subr.bf16.mxu0 0
        %501 = vmatpush1.bf16.msra.mxu0 %v477
        %502 = vmatprep.subr.bf16.mxu0 0
        %503 = vmatpush1.bf16.msra.mxu0 0
        %504 = vmatprep.subr.bf16.mxu0 0
        %505 = vmatpush1.bf16.msra.mxu0 0
        %506 = vmatprep.subr.bf16.mxu0 0
        %507 = vmatpush1.bf16.msra.mxu0 0
        %508 = vmatprep.subr.bf16.mxu0 0
        %509 = vmatpush1.bf16.msra.mxu0 0
        %510 = vmatprep.subr.bf16.mxu0 0
        %511 = vmatpush1.bf16.msra.mxu0 0
        %512 = vmatprep.subr.bf16.mxu0 0
        %513 = vmatpush1.bf16.msra.mxu0 0
        %514 = vmatprep.subr.bf16.mxu0 0
        %515 = vmatpush1.bf16.msra.mxu0 0
        %516 = vmatprep.subr.bf16.mxu0 0
        %517 = vmatpush1.bf16.msra.mxu0 0
        %518 = vmatprep.mubr.bf16.mxu0 0
        %519 = vmatmul.mubr.bf16.gmra.mrb[0].mxu0 %v436
        %v520 = vpop.f32.mrb[0].mxu0
        %v521 = vadd.f32 0.0, %v520
        %v522 = vpop.f32.mrb[0].mxu0
        %v523 = vpop.f32.mrb[0].mxu0
        %v524 = vadd.f32 0.0, %v523
        %v525 = vpop.f32.mrb[0].mxu0
        %526 = vdwg.mxu0
        %v527 = vpack.c.bf16 %v524, %v521
        %v529 = vpack.i.b16 %v431, %v431
        %v531 = vlaneseq
        %v532 = vshrl.u32 %v531, 7
        %v533 = vsub.s32 0, %v532
        %v534 = vrot.slane %v529, %v533
        %v535 = vadd.bf16 %v527, %v534
        %v536 = vmul.bf16 %v535, 1045249613
        %v537 = vmax.bf16 %v535, %v536
        %v538 = vld [vmem:[#allocation7] sm:$0xf]
        %v539 = vld [vmem:[#allocation7 + $0x4] sm:$0xf]
        %v540 = vld [vmem:[#allocation7 + $0x8] sm:$0xf]
        %v541 = vld [vmem:[#allocation7 + $0xc] sm:$0xf]
        %v542 = vld [vmem:[#allocation7 + $0x10] sm:$0xf]
        %v543 = vld [vmem:[#allocation7 + $0x14] sm:$0xf]
        %v544 = vld [vmem:[#allocation7 + $0x18] sm:$0xf]
        %v545 = vld [vmem:[#allocation7 + $0x1c] sm:$0xf]
        %v546 = vld [vmem:[#allocation7 + $0x20] sm:$0xf]
        %v547 = vld [vmem:[#allocation7 + $0x24] sm:$0xf]
        %v548 = vld [vmem:[#allocation7 + $0x28] sm:$0xf]
        %v549 = vld [vmem:[#allocation7 + $0x2c] sm:$0xf]
        %v550 = vld [vmem:[#allocation7 + $0x30] sm:$0xf]
        %v551 = vld [vmem:[#allocation7 + $0x34] sm:$0xf]
        %v552 = vld [vmem:[#allocation7 + $0x38] sm:$0xf]
        %v553 = vld [vmem:[#allocation7 + $0x3c] sm:$0xf]
        %v554 = vld [vmem:[%s4] sm:$0x1]
        %v571 = vunpack.c.l.b16 %v538
        %v572 = vunpack.c.l.b16 %v539
        %v573 = vunpack.c.l.b16 %v540
        %v574 = vunpack.c.l.b16 %v541
        %v575 = vunpack.c.l.b16 %v542
        %v576 = vunpack.c.l.b16 %v543
        %v577 = vunpack.c.l.b16 %v544
        %v578 = vunpack.c.l.b16 %v545
        %v579 = vunpack.c.l.b16 %v546
        %v580 = vunpack.c.l.b16 %v547
        %v581 = vunpack.c.l.b16 %v548
        %v582 = vunpack.c.l.b16 %v549
        %v583 = vunpack.c.l.b16 %v550
        %v584 = vunpack.c.l.b16 %v551
        %v585 = vunpack.c.l.b16 %v552
        %v586 = vunpack.c.l.b16 %v553
        %v587 = vpack.c.b16 %v572, %v571
        %v588 = vpack.c.b16 %v574, %v573
        %v589 = vpack.c.b16 %v576, %v575
        %v590 = vpack.c.b16 %v578, %v577
        %v591 = vpack.c.b16 %v580, %v579
        %v592 = vpack.c.b16 %v582, %v581
        %v593 = vpack.c.b16 %v584, %v583
        %v594 = vpack.c.b16 %v586, %v585
        %603 = vmatprep.subr.bf16.mxu0 0
        %604 = vmatpush1.bf16.msra.mxu0 %v587
        %605 = vmatprep.subr.bf16.mxu0 0
        %606 = vmatpush1.bf16.msra.mxu0 %v588
        %607 = vmatprep.subr.bf16.mxu0 0
        %608 = vmatpush1.bf16.msra.mxu0 %v589
        %609 = vmatprep.subr.bf16.mxu0 0
        %610 = vmatpush1.bf16.msra.mxu0 %v590
        %611 = vmatprep.subr.bf16.mxu0 0
        %612 = vmatpush1.bf16.msra.mxu0 %v591
        %613 = vmatprep.subr.bf16.mxu0 0
        %614 = vmatpush1.bf16.msra.mxu0 %v592
        %615 = vmatprep.subr.bf16.mxu0 0
        %616 = vmatpush1.bf16.msra.mxu0 %v593
        %617 = vmatprep.subr.bf16.mxu0 0
        %618 = vmatpush1.bf16.msra.mxu0 %v594
        %619 = vmatprep.subr.bf16.mxu0 0
        %620 = vmatpush1.bf16.msra.mxu0 0
        %621 = vmatprep.subr.bf16.mxu0 0
        %622 = vmatpush1.bf16.msra.mxu0 0
        %623 = vmatprep.subr.bf16.mxu0 0
        %624 = vmatpush1.bf16.msra.mxu0 0
        %625 = vmatprep.subr.bf16.mxu0 0
        %626 = vmatpush1.bf16.msra.mxu0 0
        %627 = vmatprep.subr.bf16.mxu0 0
        %628 = vmatpush1.bf16.msra.mxu0 0
        %629 = vmatprep.subr.bf16.mxu0 0
        %630 = vmatpush1.bf16.msra.mxu0 0
        %631 = vmatprep.subr.bf16.mxu0 0
        %632 = vmatpush1.bf16.msra.mxu0 0
        %633 = vmatprep.subr.bf16.mxu0 0
        %634 = vmatpush1.bf16.msra.mxu0 0
        %635 = vmatprep.mubr.bf16.mxu0 0
        %636 = vmatmul.mubr.bf16.gmra.mrb[0].mxu0 %v537
        %v637 = vpop.f32.mrb[0].mxu0
        %v638 = vadd.f32 0.0, %v637
        %v639 = vpop.f32.mrb[0].mxu0
        %v640 = vpop.f32.mrb[0].mxu0
        %v641 = vadd.f32 0.0, %v640
        %v642 = vpop.f32.mrb[0].mxu0
        %643 = vdwg.mxu0
        %v644 = vpack.c.bf16 %v641, %v638
        %v646 = vpack.i.b16 %v554, %v554
        %v648 = vlaneseq
        %v649 = vshrl.u32 %v648, 7
        %v650 = vsub.s32 0, %v649
        %v651 = vrot.slane %v646, %v650
        %v652 = vadd.bf16 %v644, %v651
        %v653 = vmul.bf16 %v652, 1045249613
        %v654 = vmax.bf16 %v652, %v653
        %v655 = vld [vmem:[#allocation8] sm:$0xf]
        %v656 = vld [vmem:[#allocation8 + $0x4] sm:$0xf]
        %v657 = vld [vmem:[#allocation8 + $0x8] sm:$0xf]
        %v658 = vld [vmem:[#allocation8 + $0xc] sm:$0xf]
        %v659 = vld [vmem:[#allocation8 + $0x10] sm:$0xf]
        %v660 = vld [vmem:[#allocation8 + $0x14] sm:$0xf]
        %v661 = vld [vmem:[#allocation8 + $0x18] sm:$0xf]
        %v662 = vld [vmem:[#allocation8 + $0x1c] sm:$0xf]
        %v663 = vld [vmem:[#allocation8 + $0x20] sm:$0xf]
        %v664 = vld [vmem:[#allocation8 + $0x24] sm:$0xf]
        %v665 = vld [vmem:[#allocation8 + $0x28] sm:$0xf]
        %v666 = vld [vmem:[#allocation8 + $0x2c] sm:$0xf]
        %v667 = vld [vmem:[#allocation8 + $0x30] sm:$0xf]
        %v668 = vld [vmem:[#allocation8 + $0x34] sm:$0xf]
        %v669 = vld [vmem:[#allocation8 + $0x38] sm:$0xf]
        %v670 = vld [vmem:[#allocation8 + $0x3c] sm:$0xf]
        %v671 = vld [vmem:[%s6] sm:$0x1]
        %v688 = vunpack.c.l.b16 %v655
        %v689 = vunpack.c.l.b16 %v656
        %v690 = vunpack.c.l.b16 %v657
        %v691 = vunpack.c.l.b16 %v658
        %v692 = vunpack.c.l.b16 %v659
        %v693 = vunpack.c.l.b16 %v660
        %v694 = vunpack.c.l.b16 %v661
        %v695 = vunpack.c.l.b16 %v662
        %v696 = vunpack.c.l.b16 %v663
        %v697 = vunpack.c.l.b16 %v664
        %v698 = vunpack.c.l.b16 %v665
        %v699 = vunpack.c.l.b16 %v666
        %v700 = vunpack.c.l.b16 %v667
        %v701 = vunpack.c.l.b16 %v668
        %v702 = vunpack.c.l.b16 %v669
        %v703 = vunpack.c.l.b16 %v670
        %v704 = vpack.c.b16 %v689, %v688
        %v705 = vpack.c.b16 %v691, %v690
        %v706 = vpack.c.b16 %v693, %v692
        %v707 = vpack.c.b16 %v695, %v694
        %v708 = vpack.c.b16 %v697, %v696
        %v709 = vpack.c.b16 %v699, %v698
        %v710 = vpack.c.b16 %v701, %v700
        %v711 = vpack.c.b16 %v703, %v702
        %720 = vmatprep.subr.bf16.mxu0 0
        %721 = vmatpush1.bf16.msra.mxu0 %v704
        %722 = vmatprep.subr.bf16.mxu0 0
        %723 = vmatpush1.bf16.msra.mxu0 %v705
        %724 = vmatprep.subr.bf16.mxu0 0
        %725 = vmatpush1.bf16.msra.mxu0 %v706
        %726 = vmatprep.subr.bf16.mxu0 0
        %727 = vmatpush1.bf16.msra.mxu0 %v707
        %728 = vmatprep.subr.bf16.mxu0 0
        %729 = vmatpush1.bf16.msra.mxu0 %v708
        %730 = vmatprep.subr.bf16.mxu0 0
        %731 = vmatpush1.bf16.msra.mxu0 %v709
        %732 = vmatprep.subr.bf16.mxu0 0
        %733 = vmatpush1.bf16.msra.mxu0 %v710
        %734 = vmatprep.subr.bf16.mxu0 0
        %735 = vmatpush1.bf16.msra.mxu0 %v711
        %736 = vmatprep.subr.bf16.mxu0 0
        %737 = vmatpush1.bf16.msra.mxu0 0
        %738 = vmatprep.subr.bf16.mxu0 0
        %739 = vmatpush1.bf16.msra.mxu0 0
        %740 = vmatprep.subr.bf16.mxu0 0
        %741 = vmatpush1.bf16.msra.mxu0 0
        %742 = vmatprep.subr.bf16.mxu0 0
        %743 = vmatpush1.bf16.msra.mxu0 0
        %744 = vmatprep.subr.bf16.mxu0 0
        %745 = vmatpush1.bf16.msra.mxu0 0
        %746 = vmatprep.subr.bf16.mxu0 0
        %747 = vmatpush1.bf16.msra.mxu0 0
        %748 = vmatprep.subr.bf16.mxu0 0
        %749 = vmatpush1.bf16.msra.mxu0 0
        %750 = vmatprep.subr.bf16.mxu0 0
        %751 = vmatpush1.bf16.msra.mxu0 0
        %752 = vmatprep.mubr.bf16.mxu0 0
        %753 = vmatmul.mubr.bf16.gmra.mrb[0].mxu0 %v654
        %v754 = vpop.f32.mrb[0].mxu0
        %v755 = vadd.f32 0.0, %v754
        %v756 = vpop.f32.mrb[0].mxu0
        %v757 = vpop.f32.mrb[0].mxu0
        %v758 = vadd.f32 0.0, %v757
        %v759 = vpop.f32.mrb[0].mxu0
        %760 = vdwg.mxu0
        %v761 = vpack.c.bf16 %v758, %v755
        %v763 = vpack.i.b16 %v671, %v671
        %v765 = vlaneseq
        %v766 = vshrl.u32 %v765, 7
        %v767 = vsub.s32 0, %v766
        %v768 = vrot.slane %v763, %v767
        %v769 = vadd.bf16 %v761, %v768
        %v770 = vmul.bf16 %v769, 1045249613
        %v771 = vmax.bf16 %v769, %v770
        %v772 = vld [vmem:[#allocation10] sm:$0xf]
        %v773 = vld [vmem:[#allocation10 + $0x4] sm:$0xf]
        %v774 = vld [vmem:[#allocation10 + $0x8] sm:$0xf]
        %v775 = vld [vmem:[#allocation10 + $0xc] sm:$0xf]
        %v776 = vld [vmem:[#allocation10 + $0x10] sm:$0xf]
        %v777 = vld [vmem:[#allocation10 + $0x14] sm:$0xf]
        %v778 = vld [vmem:[#allocation10 + $0x18] sm:$0xf]
        %v779 = vld [vmem:[#allocation10 + $0x1c] sm:$0xf]
        %v780 = vld [vmem:[#allocation10 + $0x20] sm:$0xf]
        %v781 = vld [vmem:[#allocation10 + $0x24] sm:$0xf]
        %v782 = vld [vmem:[#allocation10 + $0x28] sm:$0xf]
        %v783 = vld [vmem:[#allocation10 + $0x2c] sm:$0xf]
        %v784 = vld [vmem:[#allocation10 + $0x30] sm:$0xf]
        %v785 = vld [vmem:[#allocation10 + $0x34] sm:$0xf]
        %v786 = vld [vmem:[#allocation10 + $0x38] sm:$0xf]
        %v787 = vld [vmem:[#allocation10 + $0x3c] sm:$0xf]
        %v788 = vld [vmem:[%s8] sm:$0x1]
        %v790 = vlaneseq
        %v791 = vshrl.u32 %v790, 7
        %v792 = vsub.s32 0, %v791
        %v793 = vrot.slane %v788, %v792
        %v811 = vunpack.c.l.b16 %v772
        %v812 = vunpack.c.l.b16 %v773
        %v813 = vunpack.c.l.b16 %v774
        %v814 = vunpack.c.l.b16 %v775
        %v815 = vunpack.c.l.b16 %v776
        %v816 = vunpack.c.l.b16 %v777
        %v817 = vunpack.c.l.b16 %v778
        %v818 = vunpack.c.l.b16 %v779
        %v819 = vunpack.c.l.b16 %v780
        %v820 = vunpack.c.l.b16 %v781
        %v821 = vunpack.c.l.b16 %v782
        %v822 = vunpack.c.l.b16 %v783
        %v823 = vunpack.c.l.b16 %v784
        %v824 = vunpack.c.l.b16 %v785
        %v825 = vunpack.c.l.b16 %v786
        %v826 = vunpack.c.l.b16 %v787
        %v827 = vpack.c.b16 %v812, %v811
        %v828 = vpack.c.b16 %v814, %v813
        %v829 = vpack.c.b16 %v816, %v815
        %v830 = vpack.c.b16 %v818, %v817
        %v831 = vpack.c.b16 %v820, %v819
        %v832 = vpack.c.b16 %v822, %v821
        %v833 = vpack.c.b16 %v824, %v823
        %v834 = vpack.c.b16 %v826, %v825
        %843 = vmatprep.subr.bf16.mxu0 0
        %844 = vmatpush1.bf16.msra.mxu0 %v827
        %845 = vmatprep.subr.bf16.mxu0 0
        %846 = vmatpush1.bf16.msra.mxu0 %v828
        %847 = vmatprep.subr.bf16.mxu0 0
        %848 = vmatpush1.bf16.msra.mxu0 %v829
        %849 = vmatprep.subr.bf16.mxu0 0
        %850 = vmatpush1.bf16.msra.mxu0 %v830
        %851 = vmatprep.subr.bf16.mxu0 0
        %852 = vmatpush1.bf16.msra.mxu0 %v831
        %853 = vmatprep.subr.bf16.mxu0 0
        %854 = vmatpush1.bf16.msra.mxu0 %v832
        %855 = vmatprep.subr.bf16.mxu0 0
        %856 = vmatpush1.bf16.msra.mxu0 %v833
        %857 = vmatprep.subr.bf16.mxu0 0
        %858 = vmatpush1.bf16.msra.mxu0 %v834
        %859 = vmatprep.subr.bf16.mxu0 0
        %860 = vmatpush1.bf16.msra.mxu0 0
        %861 = vmatprep.subr.bf16.mxu0 0
        %862 = vmatpush1.bf16.msra.mxu0 0
        %863 = vmatprep.subr.bf16.mxu0 0
        %864 = vmatpush1.bf16.msra.mxu0 0
        %865 = vmatprep.subr.bf16.mxu0 0
        %866 = vmatpush1.bf16.msra.mxu0 0
        %867 = vmatprep.subr.bf16.mxu0 0
        %868 = vmatpush1.bf16.msra.mxu0 0
        %869 = vmatprep.subr.bf16.mxu0 0
        %870 = vmatpush1.bf16.msra.mxu0 0
        %871 = vmatprep.subr.bf16.mxu0 0
        %872 = vmatpush1.bf16.msra.mxu0 0
        %873 = vmatprep.subr.bf16.mxu0 0
        %874 = vmatpush1.bf16.msra.mxu0 0
        %875 = vmatprep.mubr.bf16.mxu0 0
        %876 = vmatmul.mubr.bf16.gmra.mrb[0].mxu0 %v771
        %v877 = vpop.f32.mrb[0].mxu0
        %v878 = vadd.f32 %v793, %v877
        %v879 = vpop.f32.mrb[0].mxu0
        %v880 = vpop.f32.mrb[0].mxu0
        %v881 = vadd.f32 %v793, %v880
        %v882 = vpop.f32.mrb[0].mxu0
        %883 = vdwg.mxu0
        %v884 = vpack.c.bf16 %v881, %v878
        %v886 = vunpack.c.l.b16 %v884
        %v887 = vunpack.c.h.b16 %v884
        %v888 = vpack.c.b16 %v886, %v886
        %v889 = vpack.c.b16 %v887, %v887
        %892 = vst [vmem:[%s408] sm:$0xf] %v888
        %893 = vst [vmem:[%s408 + $0x4] sm:$0xf] %v889
        %s894 = sand.u32 %s230, 1
        %s895 = scalar_lea.sflag [#allocation4], %s894
        %s896 = sand.u32 %s230, 1
        %s897 = smul.addr %s896, 8
        %s898 = scalar_lea.vmem [#allocation11], %s897
        // Predicated region
        $region77: #{tpu_custom_call.1} parent=55 // pred_check
          %p899 = pneg %p240
        $region78: #{tpu_custom_call.1} parent=55 // pred_check_branch
          %901 = sbr.rel (%p899) target = $region80
        $region79: #{tpu_custom_call.1} parent=55 // pred_region
          %s902 = smul.u32 2, %s28
          %s904 = ssub.s32 128, 128
          %905 = vsyncadd %s895, %s904
          %s906 = smul.addr %s902, 64
          %s907 = scalar_lea.hbm %s9, %s906
          %s908 = sshll.u32 %s898, 4
          %s909 = int_to_ptr.vmem [resolvable:$true] %s908
          %914 = dma.vmem_to_hbm [thread:$0]  %s909, 128, %s907, %s895, 64, 64, 4
        $region80: #{tpu_custom_call.1} parent=55 // pred_fallthru
          _
      $region56: #{tpu_custom_call.1} parent=5 // pred_fallthru
        _
      %p915 = scmp.le.s32.totalorder 2, %s23
      // Predicated region
      $region81: #{tpu_custom_call.1} parent=5 // pred_check
        %p916 = pneg %p915
      $region82: #{tpu_custom_call.1} parent=5 // pred_check_branch
        %918 = sbr.rel (%p916) target = $region84
      $region83: #{tpu_custom_call.1} parent=5 // pred_region
        %s919 = ssub.s32 %s23, 2
        // Predicated region
        $region85: #{tpu_custom_call.1} parent=83 // pred_check
          %p920 = pneg %p246
        $region86: #{tpu_custom_call.1} parent=83 // pred_check_branch
          %922 = sbr.rel (%p920) target = $region88
        $region87: #{tpu_custom_call.1} parent=83 // pred_region
          %s923 = sand.u32 %s231, 1
          %s924 = scalar_lea.sflag [#allocation4], %s923
          %s925 = sand.u32 %s231, 1
          %s926 = smul.addr %s925, 8
          %s927 = scalar_lea.vmem [#allocation11], %s926
          %928 = dma.done %s924, 128
        $region88: #{tpu_custom_call.1} parent=83 // pred_fallthru
          _
      $region84: #{tpu_custom_call.1} parent=5 // pred_fallthru
        _
    $region6: #{tpu_custom_call.1} parent=1 // loop_footer
      %s27 = sadd.s32 1, %s23
    $region7: #{tpu_custom_call.1} parent=1 // loop_footer_branch
      %22 = sbr.rel target = $region3
    $region8: #{tpu_custom_call.1} parent=1 // loop_exit
      _
    %929 = vsyncpa [#allocation3], 1
    %s930 = scalar_lea.sflag [#allocation3], 1
    %931 = vsyncpa %s930, 1
    %932 = vsyncpa [#allocation6], 1
    %933 = vsyncpa [#allocation9], 1
    %934 = vsyncpa [#allocation4], 1
    %s935 = scalar_lea.sflag [#allocation4], 1
    %936 = vsyncpa %s935, 1

</llo_original>
